<compile_context>
chip_gen: v5e
topology: v5e:2x2
jax: 0.10.0
libtpu: 0.0.40
codegen_flags: <defaults>
</compile_context>

<pallas_src>
import functools

import jax
import jax.numpy as jnp
from jax import lax
from jax.experimental import pallas as pl
from jax.experimental.pallas import tpu as pltpu


def _make_kernel(B, T, H, use_bf16_mxu):
    mxu_dtype = jnp.bfloat16 if use_bf16_mxu else jnp.float32

    def kernel(ids_ref, gtab_ref, whh_ref, wc_ref, bc_ref, out_ref):
        """Whole forward pass in one invocation (everything resident in VMEM).

        ids_ref : (T*B, 1) int32 token ids, TIME-MAJOR (row = t*B + b)
        gtab_ref: (V, 4H)  fused table: emb @ W_ih^T + (b_ih + b_hh)
        whh_ref : (H, 4H)  hidden->gates weights (transposed torch weight_hh_l0)
        wc_ref  : (H, O)   classifier weight (transposed)
        bc_ref  : (1, O)   classifier bias
        out_ref : (B, O)   sigmoid(logits)
        """
        V = gtab_ref.shape[0]
        N = T * B

        # ---- Embedding + input projection + bias as ONE one-hot MXU matmul ----
        ids = ids_ref[...]                                        # (N, 1) int32
        iota_v = lax.broadcasted_iota(jnp.int32, (N, V), 1)       # (N, V) 2-D
        onehot = jnp.where(iota_v == ids, 1.0, 0.0).astype(mxu_dtype)
        gates_all = jnp.dot(onehot, gtab_ref[...].astype(mxu_dtype),
                            preferred_element_type=jnp.float32)   # (N, 4H) f32

        whh = whh_ref[...].astype(mxu_dtype)                      # (H, 4H)

        # ---- Recurrence: fully unrolled static time loop (T is static) ----
        h = jnp.zeros((B, H), jnp.float32)
        c = jnp.zeros((B, H), jnp.float32)
        for t in range(T):
            # static, sublane-contiguous time-major slice -> free view
            g_x = gates_all[t * B:(t + 1) * B, :]                 # (B, 4H)
            gates = g_x + jnp.dot(h.astype(mxu_dtype), whh,
                                  preferred_element_type=jnp.float32)
            sig = jax.nn.sigmoid(gates)     # full-width EUP, slice after
            th = jnp.tanh(gates)            # full-width EUP, slice after
            i_g = sig[:, 0 * H:1 * H]
            f_g = sig[:, 1 * H:2 * H]
            g_g = th[:, 2 * H:3 * H]
            o_g = sig[:, 3 * H:4 * H]
            c = f_g * c + i_g * g_g
            h = o_g * jnp.tanh(c)

        # ---- Classifier + sigmoid on the last hidden state ----
        logits = (jnp.dot(h.astype(mxu_dtype), wc_ref[...].astype(mxu_dtype),
                          preferred_element_type=jnp.float32) + bc_ref[...])
        out_ref[...] = jax.nn.sigmoid(logits).astype(out_ref.dtype)

    return kernel


def lstm_model_forward(x_ids, params, *, use_bf16_mxu=False):
    """Full forward pass (embedding, LSTM, classifier) in one Pallas call."""
    B, T = x_ids.shape
    H = params["w_hh_t"].shape[0]
    O = params["w_cls_t"].shape[1]

    # One-time wrapper-side weight fusion (plain XLA ops on parameters):
    #   gate_table[v] = emb[v] @ W_ih^T + (b_ih + b_hh)
    gate_table = params["emb"] @ params["w_ih_t"] + params["b_gates"]   # (V, 4H)

    # Time-major flattened ids (row index = t*B + b); HBM-side reshape is free.
    ids_tm = jnp.transpose(x_ids).reshape(T * B, 1).astype(jnp.int32)

    kernel = _make_kernel(B, T, H, use_bf16_mxu)
    vmem = pl.BlockSpec(memory_space=pltpu.MemorySpace.VMEM)
    return pl.pallas_call(
        kernel,
        out_shape=jax.ShapeDtypeStruct((B, O), jnp.float32),
        in_specs=[vmem] * 5,
        out_specs=vmem,
        compiler_params=pltpu.CompilerParams(vmem_limit_bytes=32 * 1024 * 1024),
    )(ids_tm, gate_table, params["w_hh_t"], params["w_cls_t"], params["b_cls"])


def reference_forward(x_ids, params):
    """Pure-JAX reference matching torch.nn.LSTM semantics (gate order i,f,g,o)."""
    emb = jnp.take(params["emb"], x_ids, axis=0)                 # (B, T, E)
    H = params["w_hh_t"].shape[0]
    B = x_ids.shape[0]

    def step(carry, x_t):
        h, c = carry
        gates = x_t @ params["w_ih_t"] + h @ params["w_hh_t"] + params["b_gates"]
        i = jax.nn.sigmoid(gates[:, 0 * H:1 * H])
        f = jax.nn.sigmoid(gates[:, 1 * H:2 * H])
        g = jnp.tanh(gates[:, 2 * H:3 * H])
        o = jax.nn.sigmoid(gates[:, 3 * H:4 * H])
        c = f * c + i * g
        h = o * jnp.tanh(c)
        return (h, c), None

    h0 = jnp.zeros((B, H), jnp.float32)
    c0 = jnp.zeros((B, H), jnp.float32)
    (h_T, _), _ = lax.scan(step, (h0, c0), jnp.swapaxes(emb, 0, 1))
    return jax.nn.sigmoid(h_T @ params["w_cls_t"] + params["b_cls"])


def init_params(key, vs, emb_dim, hidden_dim, out_dim):
    ks = jax.random.split(key, 7)
    scale = 0.1
    emb = scale * jax.random.normal(ks[0], (vs, emb_dim), jnp.float32)
    emb = emb.at[0].set(0.0)                                     # padding_idx=0
    w_ih = scale * jax.random.normal(ks[1], (4 * hidden_dim, emb_dim), jnp.float32)
    w_hh = scale * jax.random.normal(ks[2], (4 * hidden_dim, hidden_dim), jnp.float32)
    b_ih = scale * jax.random.normal(ks[3], (4 * hidden_dim,), jnp.float32)
    b_hh = scale * jax.random.normal(ks[4], (4 * hidden_dim,), jnp.float32)
    w_cls = scale * jax.random.normal(ks[5], (out_dim, hidden_dim), jnp.float32)
    b_cls = scale * jax.random.normal(ks[6], (out_dim,), jnp.float32)
    return {
        "emb": emb,
        "w_ih_t": w_ih.T,                                        # (E, 4H)
        "w_hh_t": w_hh.T,                                        # (H, 4H)
        "b_gates": (b_ih + b_hh)[None, :],                       # (1, 4H)
        "w_cls_t": w_cls.T,                                      # (H, O)
        "b_cls": b_cls[None, :],                                 # (1, O)
    }


if __name__ == "__main__":
    # cfg(vs=50, emb=16, hidden=32); LSTMModel(out_dim=5, cfg)
    VS, EMB, HID, OUT = 50, 16, 32, 5
    B, T = 2, 8

    key = jax.random.PRNGKey(0)
    k_param, k_ids = jax.random.split(key)
    params = init_params(k_param, VS, EMB, HID, OUT)

    x_ids = jax.random.randint(k_ids, (B, T), 0, VS, dtype=jnp.int32)

    out = lstm_model_forward(x_ids, params)          # default: f32 MXU operands
    out = jax.block_until_ready(out)

    ref = reference_forward(x_ids, params)
    assert out.shape == (B, OUT)
    assert jnp.allclose(out, ref, atol=1e-5, rtol=1e-5), "mismatch vs reference"

    print("KERNEL_OK")
</pallas_src>

<mosaic_0001>
module attributes {stable_mosaic.version = 11 : i64} {
  func.func @kernel(%arg0: memref<16x1xi32, #tpu.memory_space<vmem>>, %arg1: memref<50x128xf32, #tpu.memory_space<vmem>>, %arg2: memref<32x128xf32, #tpu.memory_space<vmem>>, %arg3: memref<32x5xf32, #tpu.memory_space<vmem>>, %arg4: memref<1x5xf32, #tpu.memory_space<vmem>>, %arg5: memref<2x5xf32, #tpu.memory_space<vmem>>) attributes {dimension_semantics = [], scalar_prefetch = 0 : i64, scratch_operands = 0 : i64, tpu.core_type = #tpu.core_type<tc>} {
    %c0 = arith.constant 0 : index
    %c0_0 = arith.constant 0 : index
    %0 = vector.load %arg0[%c0, %c0_0] : memref<16x1xi32, #tpu.memory_space<vmem>>, vector<16x1xi32>
    %1 = tpu.iota {dimensions = array<i32: 1>} : vector<16x50xi32>
    %2 = vector.broadcast %0 : vector<16x1xi32> to vector<16x50xi32>
    %3 = arith.cmpi eq, %1, %2 : vector<16x50xi32>
    %cst = arith.constant 1.000000e+00 : f32
    %cst_1 = arith.constant 0.000000e+00 : f32
    %4 = vector.broadcast %cst : f32 to vector<16x50xf32>
    %5 = vector.broadcast %cst_1 : f32 to vector<16x50xf32>
    %6 = arith.select %3, %4, %5 : vector<16x50xi1>, vector<16x50xf32>
    %c0_2 = arith.constant 0 : index
    %c0_3 = arith.constant 0 : index
    %7 = vector.load %arg1[%c0_2, %c0_3] : memref<50x128xf32, #tpu.memory_space<vmem>>, vector<50x128xf32>
    %cst_4 = arith.constant dense<0.000000e+00> : vector<16x128xf32>
    %8 = tpu.matmul %6, %7, %cst_4 {dimension_numbers = #tpu.dot_dimension_numbers<[1], [0], [0], [1], [0, 0, 1, 1], [], []>} : vector<16x50xf32>, vector<50x128xf32>, vector<16x128xf32> -> vector<16x128xf32>
    %c0_5 = arith.constant 0 : index
    %c0_6 = arith.constant 0 : index
    %9 = vector.load %arg2[%c0_5, %c0_6] : memref<32x128xf32, #tpu.memory_space<vmem>>, vector<32x128xf32>
    %cst_7 = arith.constant 0.000000e+00 : f32
    %10 = vector.broadcast %cst_7 : f32 to vector<2x32xf32>
    %cst_8 = arith.constant 0.000000e+00 : f32
    %11 = vector.broadcast %cst_8 : f32 to vector<2x32xf32>
    %12 = vector.extract_strided_slice %8 {offsets = [0, 0], sizes = [2, 128], strides = [1, 1]} : vector<16x128xf32> to vector<2x128xf32>
    %cst_9 = arith.constant dense<0.000000e+00> : vector<2x128xf32>
    %13 = tpu.matmul %10, %9, %cst_9 {dimension_numbers = #tpu.dot_dimension_numbers<[1], [0], [0], [1], [0, 0, 1, 1], [], []>} : vector<2x32xf32>, vector<32x128xf32>, vector<2x128xf32> -> vector<2x128xf32>
    %14 = arith.addf %12, %13 : vector<2x128xf32>
    %15 = arith.negf %14 : vector<2x128xf32>
    %16 = math.exp %15 : vector<2x128xf32>
    %cst_10 = arith.constant 1.000000e+00 : f32
    %17 = vector.broadcast %cst_10 : f32 to vector<2x128xf32>
    %18 = arith.addf %17, %16 : vector<2x128xf32>
    %19 = arith.divf %17, %18 : vector<2x128xf32>
    %20 = math.tanh %14 : vector<2x128xf32>
    %21 = vector.extract_strided_slice %19 {offsets = [0, 0], sizes = [2, 32], strides = [1, 1]} : vector<2x128xf32> to vector<2x32xf32>
    %22 = vector.extract_strided_slice %19 {offsets = [0, 32], sizes = [2, 32], strides = [1, 1]} : vector<2x128xf32> to vector<2x32xf32>
    %23 = vector.extract_strided_slice %20 {offsets = [0, 64], sizes = [2, 32], strides = [1, 1]} : vector<2x128xf32> to vector<2x32xf32>
    %24 = vector.extract_strided_slice %19 {offsets = [0, 96], sizes = [2, 32], strides = [1, 1]} : vector<2x128xf32> to vector<2x32xf32>
    %25 = arith.mulf %22, %11 : vector<2x32xf32>
    %26 = arith.mulf %21, %23 : vector<2x32xf32>
    %27 = arith.addf %25, %26 : vector<2x32xf32>
    %28 = math.tanh %27 : vector<2x32xf32>
    %29 = arith.mulf %24, %28 : vector<2x32xf32>
    %30 = vector.extract_strided_slice %8 {offsets = [2, 0], sizes = [2, 128], strides = [1, 1]} : vector<16x128xf32> to vector<2x128xf32>
    %cst_11 = arith.constant dense<0.000000e+00> : vector<2x128xf32>
    %31 = tpu.matmul %29, %9, %cst_11 {dimension_numbers = #tpu.dot_dimension_numbers<[1], [0], [0], [1], [0, 0, 1, 1], [], []>} : vector<2x32xf32>, vector<32x128xf32>, vector<2x128xf32> -> vector<2x128xf32>
    %32 = arith.addf %30, %31 : vector<2x128xf32>
    %33 = arith.negf %32 : vector<2x128xf32>
    %34 = math.exp %33 : vector<2x128xf32>
    %cst_12 = arith.constant 1.000000e+00 : f32
    %35 = vector.broadcast %cst_12 : f32 to vector<2x128xf32>
    %36 = arith.addf %35, %34 : vector<2x128xf32>
    %37 = arith.divf %35, %36 : vector<2x128xf32>
    %38 = math.tanh %32 : vector<2x128xf32>
    %39 = vector.extract_strided_slice %37 {offsets = [0, 0], sizes = [2, 32], strides = [1, 1]} : vector<2x128xf32> to vector<2x32xf32>
    %40 = vector.extract_strided_slice %37 {offsets = [0, 32], sizes = [2, 32], strides = [1, 1]} : vector<2x128xf32> to vector<2x32xf32>
    %41 = vector.extract_strided_slice %38 {offsets = [0, 64], sizes = [2, 32], strides = [1, 1]} : vector<2x128xf32> to vector<2x32xf32>
    %42 = vector.extract_strided_slice %37 {offsets = [0, 96], sizes = [2, 32], strides = [1, 1]} : vector<2x128xf32> to vector<2x32xf32>
    %43 = arith.mulf %40, %27 : vector<2x32xf32>
    %44 = arith.mulf %39, %41 : vector<2x32xf32>
    %45 = arith.addf %43, %44 : vector<2x32xf32>
    %46 = math.tanh %45 : vector<2x32xf32>
    %47 = arith.mulf %42, %46 : vector<2x32xf32>
    %48 = vector.extract_strided_slice %8 {offsets = [4, 0], sizes = [2, 128], strides = [1, 1]} : vector<16x128xf32> to vector<2x128xf32>
    %cst_13 = arith.constant dense<0.000000e+00> : vector<2x128xf32>
    %49 = tpu.matmul %47, %9, %cst_13 {dimension_numbers = #tpu.dot_dimension_numbers<[1], [0], [0], [1], [0, 0, 1, 1], [], []>} : vector<2x32xf32>, vector<32x128xf32>, vector<2x128xf32> -> vector<2x128xf32>
    %50 = arith.addf %48, %49 : vector<2x128xf32>
    %51 = arith.negf %50 : vector<2x128xf32>
    %52 = math.exp %51 : vector<2x128xf32>
    %cst_14 = arith.constant 1.000000e+00 : f32
    %53 = vector.broadcast %cst_14 : f32 to vector<2x128xf32>
    %54 = arith.addf %53, %52 : vector<2x128xf32>
    %55 = arith.divf %53, %54 : vector<2x128xf32>
    %56 = math.tanh %50 : vector<2x128xf32>
    %57 = vector.extract_strided_slice %55 {offsets = [0, 0], sizes = [2, 32], strides = [1, 1]} : vector<2x128xf32> to vector<2x32xf32>
    %58 = vector.extract_strided_slice %55 {offsets = [0, 32], sizes = [2, 32], strides = [1, 1]} : vector<2x128xf32> to vector<2x32xf32>
    %59 = vector.extract_strided_slice %56 {offsets = [0, 64], sizes = [2, 32], strides = [1, 1]} : vector<2x128xf32> to vector<2x32xf32>
    %60 = vector.extract_strided_slice %55 {offsets = [0, 96], sizes = [2, 32], strides = [1, 1]} : vector<2x128xf32> to vector<2x32xf32>
    %61 = arith.mulf %58, %45 : vector<2x32xf32>
    %62 = arith.mulf %57, %59 : vector<2x32xf32>
    %63 = arith.addf %61, %62 : vector<2x32xf32>
    %64 = math.tanh %63 : vector<2x32xf32>
    %65 = arith.mulf %60, %64 : vector<2x32xf32>
    %66 = vector.extract_strided_slice %8 {offsets = [6, 0], sizes = [2, 128], strides = [1, 1]} : vector<16x128xf32> to vector<2x128xf32>
    %cst_15 = arith.constant dense<0.000000e+00> : vector<2x128xf32>
    %67 = tpu.matmul %65, %9, %cst_15 {dimension_numbers = #tpu.dot_dimension_numbers<[1], [0], [0], [1], [0, 0, 1, 1], [], []>} : vector<2x32xf32>, vector<32x128xf32>, vector<2x128xf32> -> vector<2x128xf32>
    %68 = arith.addf %66, %67 : vector<2x128xf32>
    %69 = arith.negf %68 : vector<2x128xf32>
    %70 = math.exp %69 : vector<2x128xf32>
    %cst_16 = arith.constant 1.000000e+00 : f32
    %71 = vector.broadcast %cst_16 : f32 to vector<2x128xf32>
    %72 = arith.addf %71, %70 : vector<2x128xf32>
    %73 = arith.divf %71, %72 : vector<2x128xf32>
    %74 = math.tanh %68 : vector<2x128xf32>
    %75 = vector.extract_strided_slice %73 {offsets = [0, 0], sizes = [2, 32], strides = [1, 1]} : vector<2x128xf32> to vector<2x32xf32>
    %76 = vector.extract_strided_slice %73 {offsets = [0, 32], sizes = [2, 32], strides = [1, 1]} : vector<2x128xf32> to vector<2x32xf32>
    %77 = vector.extract_strided_slice %74 {offsets = [0, 64], sizes = [2, 32], strides = [1, 1]} : vector<2x128xf32> to vector<2x32xf32>
    %78 = vector.extract_strided_slice %73 {offsets = [0, 96], sizes = [2, 32], strides = [1, 1]} : vector<2x128xf32> to vector<2x32xf32>
    %79 = arith.mulf %76, %63 : vector<2x32xf32>
    %80 = arith.mulf %75, %77 : vector<2x32xf32>
    %81 = arith.addf %79, %80 : vector<2x32xf32>
    %82 = math.tanh %81 : vector<2x32xf32>
    %83 = arith.mulf %78, %82 : vector<2x32xf32>
    %84 = vector.extract_strided_slice %8 {offsets = [8, 0], sizes = [2, 128], strides = [1, 1]} : vector<16x128xf32> to vector<2x128xf32>
    %cst_17 = arith.constant dense<0.000000e+00> : vector<2x128xf32>
    %85 = tpu.matmul %83, %9, %cst_17 {dimension_numbers = #tpu.dot_dimension_numbers<[1], [0], [0], [1], [0, 0, 1, 1], [], []>} : vector<2x32xf32>, vector<32x128xf32>, vector<2x128xf32> -> vector<2x128xf32>
    %86 = arith.addf %84, %85 : vector<2x128xf32>
    %87 = arith.negf %86 : vector<2x128xf32>
    %88 = math.exp %87 : vector<2x128xf32>
    %cst_18 = arith.constant 1.000000e+00 : f32
    %89 = vector.broadcast %cst_18 : f32 to vector<2x128xf32>
    %90 = arith.addf %89, %88 : vector<2x128xf32>
    %91 = arith.divf %89, %90 : vector<2x128xf32>
    %92 = math.tanh %86 : vector<2x128xf32>
    %93 = vector.extract_strided_slice %91 {offsets = [0, 0], sizes = [2, 32], strides = [1, 1]} : vector<2x128xf32> to vector<2x32xf32>
    %94 = vector.extract_strided_slice %91 {offsets = [0, 32], sizes = [2, 32], strides = [1, 1]} : vector<2x128xf32> to vector<2x32xf32>
    %95 = vector.extract_strided_slice %92 {offsets = [0, 64], sizes = [2, 32], strides = [1, 1]} : vector<2x128xf32> to vector<2x32xf32>
    %96 = vector.extract_strided_slice %91 {offsets = [0, 96], sizes = [2, 32], strides = [1, 1]} : vector<2x128xf32> to vector<2x32xf32>
    %97 = arith.mulf %94, %81 : vector<2x32xf32>
    %98 = arith.mulf %93, %95 : vector<2x32xf32>
    %99 = arith.addf %97, %98 : vector<2x32xf32>
    %100 = math.tanh %99 : vector<2x32xf32>
    %101 = arith.mulf %96, %100 : vector<2x32xf32>
    %102 = vector.extract_strided_slice %8 {offsets = [10, 0], sizes = [2, 128], strides = [1, 1]} : vector<16x128xf32> to vector<2x128xf32>
    %cst_19 = arith.constant dense<0.000000e+00> : vector<2x128xf32>
    %103 = tpu.matmul %101, %9, %cst_19 {dimension_numbers = #tpu.dot_dimension_numbers<[1], [0], [0], [1], [0, 0, 1, 1], [], []>} : vector<2x32xf32>, vector<32x128xf32>, vector<2x128xf32> -> vector<2x128xf32>
    %104 = arith.addf %102, %103 : vector<2x128xf32>
    %105 = arith.negf %104 : vector<2x128xf32>
    %106 = math.exp %105 : vector<2x128xf32>
    %cst_20 = arith.constant 1.000000e+00 : f32
    %107 = vector.broadcast %cst_20 : f32 to vector<2x128xf32>
    %108 = arith.addf %107, %106 : vector<2x128xf32>
    %109 = arith.divf %107, %108 : vector<2x128xf32>
    %110 = math.tanh %104 : vector<2x128xf32>
    %111 = vector.extract_strided_slice %109 {offsets = [0, 0], sizes = [2, 32], strides = [1, 1]} : vector<2x128xf32> to vector<2x32xf32>
    %112 = vector.extract_strided_slice %109 {offsets = [0, 32], sizes = [2, 32], strides = [1, 1]} : vector<2x128xf32> to vector<2x32xf32>
    %113 = vector.extract_strided_slice %110 {offsets = [0, 64], sizes = [2, 32], strides = [1, 1]} : vector<2x128xf32> to vector<2x32xf32>
    %114 = vector.extract_strided_slice %109 {offsets = [0, 96], sizes = [2, 32], strides = [1, 1]} : vector<2x128xf32> to vector<2x32xf32>
    %115 = arith.mulf %112, %99 : vector<2x32xf32>
    %116 = arith.mulf %111, %113 : vector<2x32xf32>
    %117 = arith.addf %115, %116 : vector<2x32xf32>
    %118 = math.tanh %117 : vector<2x32xf32>
    %119 = arith.mulf %114, %118 : vector<2x32xf32>
    %120 = vector.extract_strided_slice %8 {offsets = [12, 0], sizes = [2, 128], strides = [1, 1]} : vector<16x128xf32> to vector<2x128xf32>
    %cst_21 = arith.constant dense<0.000000e+00> : vector<2x128xf32>
    %121 = tpu.matmul %119, %9, %cst_21 {dimension_numbers = #tpu.dot_dimension_numbers<[1], [0], [0], [1], [0, 0, 1, 1], [], []>} : vector<2x32xf32>, vector<32x128xf32>, vector<2x128xf32> -> vector<2x128xf32>
    %122 = arith.addf %120, %121 : vector<2x128xf32>
    %123 = arith.negf %122 : vector<2x128xf32>
    %124 = math.exp %123 : vector<2x128xf32>
    %cst_22 = arith.constant 1.000000e+00 : f32
    %125 = vector.broadcast %cst_22 : f32 to vector<2x128xf32>
    %126 = arith.addf %125, %124 : vector<2x128xf32>
    %127 = arith.divf %125, %126 : vector<2x128xf32>
    %128 = math.tanh %122 : vector<2x128xf32>
    %129 = vector.extract_strided_slice %127 {offsets = [0, 0], sizes = [2, 32], strides = [1, 1]} : vector<2x128xf32> to vector<2x32xf32>
    %130 = vector.extract_strided_slice %127 {offsets = [0, 32], sizes = [2, 32], strides = [1, 1]} : vector<2x128xf32> to vector<2x32xf32>
    %131 = vector.extract_strided_slice %128 {offsets = [0, 64], sizes = [2, 32], strides = [1, 1]} : vector<2x128xf32> to vector<2x32xf32>
    %132 = vector.extract_strided_slice %127 {offsets = [0, 96], sizes = [2, 32], strides = [1, 1]} : vector<2x128xf32> to vector<2x32xf32>
    %133 = arith.mulf %130, %117 : vector<2x32xf32>
    %134 = arith.mulf %129, %131 : vector<2x32xf32>
    %135 = arith.addf %133, %134 : vector<2x32xf32>
    %136 = math.tanh %135 : vector<2x32xf32>
    %137 = arith.mulf %132, %136 : vector<2x32xf32>
    %138 = vector.extract_strided_slice %8 {offsets = [14, 0], sizes = [2, 128], strides = [1, 1]} : vector<16x128xf32> to vector<2x128xf32>
    %cst_23 = arith.constant dense<0.000000e+00> : vector<2x128xf32>
    %139 = tpu.matmul %137, %9, %cst_23 {dimension_numbers = #tpu.dot_dimension_numbers<[1], [0], [0], [1], [0, 0, 1, 1], [], []>} : vector<2x32xf32>, vector<32x128xf32>, vector<2x128xf32> -> vector<2x128xf32>
    %140 = arith.addf %138, %139 : vector<2x128xf32>
    %141 = arith.negf %140 : vector<2x128xf32>
    %142 = math.exp %141 : vector<2x128xf32>
    %cst_24 = arith.constant 1.000000e+00 : f32
    %143 = vector.broadcast %cst_24 : f32 to vector<2x128xf32>
    %144 = arith.addf %143, %142 : vector<2x128xf32>
    %145 = arith.divf %143, %144 : vector<2x128xf32>
    %146 = math.tanh %140 : vector<2x128xf32>
    %147 = vector.extract_strided_slice %145 {offsets = [0, 0], sizes = [2, 32], strides = [1, 1]} : vector<2x128xf32> to vector<2x32xf32>
    %148 = vector.extract_strided_slice %145 {offsets = [0, 32], sizes = [2, 32], strides = [1, 1]} : vector<2x128xf32> to vector<2x32xf32>
    %149 = vector.extract_strided_slice %146 {offsets = [0, 64], sizes = [2, 32], strides = [1, 1]} : vector<2x128xf32> to vector<2x32xf32>
    %150 = vector.extract_strided_slice %145 {offsets = [0, 96], sizes = [2, 32], strides = [1, 1]} : vector<2x128xf32> to vector<2x32xf32>
    %151 = arith.mulf %148, %135 : vector<2x32xf32>
    %152 = arith.mulf %147, %149 : vector<2x32xf32>
    %153 = arith.addf %151, %152 : vector<2x32xf32>
    %154 = math.tanh %153 : vector<2x32xf32>
    %155 = arith.mulf %150, %154 : vector<2x32xf32>
    %c0_25 = arith.constant 0 : index
    %c0_26 = arith.constant 0 : index
    %156 = vector.load %arg3[%c0_25, %c0_26] : memref<32x5xf32, #tpu.memory_space<vmem>>, vector<32x5xf32>
    %cst_27 = arith.constant dense<0.000000e+00> : vector<2x5xf32>
    %157 = tpu.matmul %155, %156, %cst_27 {dimension_numbers = #tpu.dot_dimension_numbers<[1], [0], [0], [1], [0, 0, 1, 1], [], []>} : vector<2x32xf32>, vector<32x5xf32>, vector<2x5xf32> -> vector<2x5xf32>
    %c0_28 = arith.constant 0 : index
    %c0_29 = arith.constant 0 : index
    %158 = vector.load %arg4[%c0_28, %c0_29] : memref<1x5xf32, #tpu.memory_space<vmem>>, vector<1x5xf32>
    %159 = vector.broadcast %158 : vector<1x5xf32> to vector<2x5xf32>
    %160 = arith.addf %157, %159 : vector<2x5xf32>
    %161 = arith.negf %160 : vector<2x5xf32>
    %162 = math.exp %161 : vector<2x5xf32>
    %cst_30 = arith.constant 1.000000e+00 : f32
    %163 = vector.broadcast %cst_30 : f32 to vector<2x5xf32>
    %164 = arith.addf %163, %162 : vector<2x5xf32>
    %165 = arith.divf %163, %164 : vector<2x5xf32>
    %c0_31 = arith.constant 0 : index
    %c0_32 = arith.constant 0 : index
    %166 = vector.load %arg5[%c0_31, %c0_32] : memref<2x5xf32, #tpu.memory_space<vmem>>, vector<2x5xf32>
    tpu.vector_store %arg5[%c0_31, %c0_32], %165 {strides = array<i32>} : memref<2x5xf32, #tpu.memory_space<vmem>>, vector<2x5xf32>,
    return
  }
}

</mosaic_0001>

<llo_original>
// kernel: tpu_custom_call.1
$region0: #{tpu_custom_call.1}
  #allocation0 [shape = 'u32[]', space=smem, size = 0x4, offset = 0x4, fixed_abs, tag = 'smem constant byte address 0x4 - core index']
  #allocation1 [shape = 'u32[72,128]{1,0:T(1,128)}', space=vmem, size = 0x9000, scoped, tag = 'internal scratch']
  %s0 = inlined_call_operand.vmem [shape: s32[16,1], index: 0, kind: input, shape index: {}]
  %s1 = inlined_call_operand.hbm [shape: f32[50,128], index: 1, kind: input, shape index: {}]
  %s2 = inlined_call_operand.vmem [shape: f32[32,128], index: 2, kind: input, shape index: {}]
  %s3 = inlined_call_operand.vmem [shape: f32[32,5], index: 3, kind: input, shape index: {}]
  %s4 = inlined_call_operand.vmem [shape: f32[1,5], index: 4, kind: input, shape index: {}]
  %s5 = inlined_call_operand.hbm [shape: f32[2,5], index: 5, kind: output, shape index: {}]
  %s6 = sld [smem:[#allocation0]]
  $region34: #{tpu_custom_call.1} parent=0
    _
  %s8 = ssub.s32 1, %s6
  %s9 = scalar_select 0, %s8, %s6
  $region1: #{tpu_custom_call.1} parent=0
    #allocation2 [shape = 'u8[28672]{0}', space=vmem, size = 0x7000, scoped, tag = 'input window, operand 1, single buffered']
    #allocation3 [shape = 's32[1]{0}', space=sflag, size = 0x4, scoped, tag = 'scoped memory for tpu_custom_call.1']
    #allocation4 [shape = 's32[1]{0}', space=sflag, size = 0x4, scoped, tag = 'scoped memory for tpu_custom_call.1']
    #allocation5 [shape = 'u8[1024]{0}', space=vmem, size = 0x400, scoped, tag = 'output window, operand 0, single buffered']
    %10 = vsyncpa [#allocation3], 0
    %11 = vsyncpa [#allocation4], 0
    // Predicated region
    $region2: #{tpu_custom_call.1} parent=1 // pred_check
      _
    $region3: #{tpu_custom_call.1} parent=1 // pred_check_branch
      %13 = sbr.rel (0) target = $region5
    $region4: #{tpu_custom_call.1} parent=1 // pred_region
      _
    $region5: #{tpu_custom_call.1} parent=1 // pred_fallthru
      _
    // Predicated region
    $region6: #{tpu_custom_call.1} parent=1 // pred_check
      _
    $region7: #{tpu_custom_call.1} parent=1 // pred_check_branch
      %15 = sbr.rel (0) target = $region9
    $region8: #{tpu_custom_call.1} parent=1 // pred_region
      %17 = vsyncadd [#allocation3], 0
      %s18 = sshll.u32 %s1, 4
      %s19 = int_to_ptr.hbm [resolvable:$true] %s18
      %s20 = sshll.u32 [#allocation2], 4
      %s21 = int_to_ptr.vmem [resolvable:$true] %s20
      %26 = dma.hbm_to_vmem [thread:$0]  %s19, 896, %s21, [#allocation3], 128, 128, 8
    $region9: #{tpu_custom_call.1} parent=1 // pred_fallthru
      _
    // Predicated region
    $region10: #{tpu_custom_call.1} parent=1 // pred_check
      _
    $region11: #{tpu_custom_call.1} parent=1 // pred_check_branch
      %28 = sbr.rel (0) target = $region13
    $region12: #{tpu_custom_call.1} parent=1 // pred_region
      _
    $region13: #{tpu_custom_call.1} parent=1 // pred_fallthru
      _
    // Predicated region
    $region14: #{tpu_custom_call.1} parent=1 // pred_check
      _
    $region15: #{tpu_custom_call.1} parent=1 // pred_check_branch
      %30 = sbr.rel (0) target = $region17
    $region16: #{tpu_custom_call.1} parent=1 // pred_region
      _
    $region17: #{tpu_custom_call.1} parent=1 // pred_fallthru
      _
    // Predicated region
    $region18: #{tpu_custom_call.1} parent=1 // pred_check
      _
    $region19: #{tpu_custom_call.1} parent=1 // pred_check_branch
      %32 = sbr.rel (0) target = $region21
    $region20: #{tpu_custom_call.1} parent=1 // pred_region
      _
    $region21: #{tpu_custom_call.1} parent=1 // pred_fallthru
      _
    // Predicated region
    $region22: #{tpu_custom_call.1} parent=1 // pred_check
      _
    $region23: #{tpu_custom_call.1} parent=1 // pred_check_branch
      %34 = sbr.rel (0) target = $region25
    $region24: #{tpu_custom_call.1} parent=1 // pred_region
      %36 = dma.done [#allocation3], 896
    $region25: #{tpu_custom_call.1} parent=1 // pred_fallthru
      _
    %v37 = vld [vmem:[%s0] sm:$0xff]
    %v38 = vld [vmem:[%s0 + $0x8] sm:$0xff]
    %v39 = vlaneseq
    %v40 = vand.u32 %v39, 127
    %41 = vset.pattern.permute.xlu0 0
    %42 = vperm.xlu0 %41, %v37
    %v43 = vpop.permute.xlu0 %42
    %44 = vset.pattern.permute.xlu0 0
    %45 = vperm.xlu0 %44, %v38
    %v46 = vpop.permute.xlu0 %45
    %vm47 = vcmp.eq.s32.totalorder %v40, %v43
    %vm48 = vcmp.eq.s32.totalorder %v40, %v46
    %v49 = vsel %vm47, 1.0, 0.0
    %v50 = vsel %vm48, 1.0, 0.0
    %v51 = vld [vmem:[#allocation2] sm:$0xff]
    %v52 = vld [vmem:[#allocation2 + $0x8] sm:$0xff]
    %v53 = vld [vmem:[#allocation2 + $0x10] sm:$0xff]
    %v54 = vld [vmem:[#allocation2 + $0x18] sm:$0xff]
    %v55 = vld [vmem:[#allocation2 + $0x20] sm:$0xff]
    %v56 = vld [vmem:[#allocation2 + $0x28] sm:$0xff]
    %v57 = vld [vmem:[#allocation2 + $0x30] sm:$0x3]
    %vm58 = vcmask 408576
    %v60 = vsel %vm58, %v49, 0
    %v63 = vsel %vm58, %v50, 0
    %vm65 = vcmask 1041408
    %v67 = vsel %vm65, %v57, 0
    %69 = vmatpush.msra.mxu0 0.0
    %70 = vmatpush.msra.mxu0 0.0
    %71 = vmatpush.msra.mxu0 0.0
    %72 = vmatpush.msra.mxu0 0.0
    %73 = vmatpush.msra.mxu0 0.0
    %74 = vmatpush.msra.mxu0 0.0
    %75 = vmatpush.msra.mxu0 0.0
    %76 = vmatpush.msra.mxu0 0.0
    %77 = vmatpush.msra.mxu0 0.0
    %78 = vmatpush.msra.mxu0 %v67
    %79 = vmatpush.msra.mxu0 %v56
    %80 = vmatpush.msra.mxu0 %v55
    %81 = vmatpush.msra.mxu0 %v54
    %82 = vmatpush.msra.mxu0 %v53
    %83 = vmatpush.msra.mxu0 %v52
    %84 = vmatpush.msra.mxu0 %v51
    %85 = vmatmul.f32.gmra.mxu0 %v60
    %v86 = vpop.f32.mrf.mxu0
    %v87 = vadd.f32 0.0, %v86
    %88 = vmatmul.f32.gmra.mxu0 %v63
    %v89 = vpop.f32.mrf.mxu0
    %v90 = vadd.f32 0.0, %v89
    %91 = vdwg.mxu0
    %v92 = vld [vmem:[%s2] sm:$0xff]
    %v93 = vld [vmem:[%s2 + $0x8] sm:$0xff]
    %v94 = vld [vmem:[%s2 + $0x10] sm:$0xff]
    %v95 = vld [vmem:[%s2 + $0x18] sm:$0xff]
    %vm96 = vcmask 261120
    %v98 = vsel %vm96, 0.0, 0
    %100 = vmatpush.msra.mxu0 0.0
    %101 = vmatpush.msra.mxu0 0.0
    %102 = vmatpush.msra.mxu0 0.0
    %103 = vmatpush.msra.mxu0 0.0
    %104 = vmatpush.msra.mxu0 0.0
    %105 = vmatpush.msra.mxu0 0.0
    %106 = vmatpush.msra.mxu0 0.0
    %107 = vmatpush.msra.mxu0 0.0
    %108 = vmatpush.msra.mxu0 0.0
    %109 = vmatpush.msra.mxu0 0.0
    %110 = vmatpush.msra.mxu0 0.0
    %111 = vmatpush.msra.mxu0 0.0
    %112 = vmatpush.msra.mxu0 %v95
    %113 = vmatpush.msra.mxu0 %v94
    %114 = vmatpush.msra.mxu0 %v93
    %115 = vmatpush.msra.mxu0 %v92
    %116 = vmatmul.f32.gmra.mxu0 %v98
    %v117 = vpop.f32.mrf.mxu0
    %v118 = vadd.f32 0.0, %v117
    %119 = vdwg.mxu0
    %v120 = vadd.f32 %v87, %v118
    %v121 = vxor.u32 %v120, 2147483648
    %v122 = vmul.f32 %v121, 1.442695
    %v123 = vpow.pop %v122
    %v124 = vadd.f32 %v123, 1.0
    %v125 = vrcp.pop %v124
    %v126 = vmul.f32 %v124, %v125
    %v127 = vsub.f32 1.0, %v126
    %v128 = vmul.f32 %v125, %v127
    %v129 = vadd.f32 %v125, %v128
    %vm130 = vweird.f32 %v124
    %vm131 = vweird.f32 %v125
    %vm132 = vmor %vm130, %vm131
    %v133 = vsel %vm132, %v125, %v129
    %v134 = vand.u32 2147483647, %v124
    %vm135 = vcmp.eq.f32.partialorder %v134, 8.507059e+37
    %v136 = vand.u32 %v124, 2147483648
    %v137 = vor.u32 1.1754944e-38, %v136
    %v138 = vsel %vm135, %v137, %v133
    %v139 = vmul.f32 1.0, %v138
    %v140 = vtanh.pop %v120
    %v141 = vmul.f32 %v139, 0.0
    %143 = vrot.lane.b32.xlu0 %v140, 64
    %v144 = vpop.permute.xlu0 %143
    %v146 = vmul.f32 %v139, %v144
    %148 = vrot.lane.b32.xlu0 %v146, 32
    %v149 = vpop.permute.xlu0 %148
    %v151 = vadd.f32 %v141, %v149
    %v152 = vtanh.pop %v151
    %154 = vrot.lane.b32.xlu0 %v152, 64
    %v155 = vpop.permute.xlu0 %154
    %v157 = vmul.f32 %v139, %v155
    %159 = vrot.lane.b32.xlu0 %v157, 32
    %v160 = vpop.permute.xlu0 %159
    %v161 = vsel %vm96, %v160, 0
    %163 = vmatpush.msra.mxu0 0.0
    %164 = vmatpush.msra.mxu0 0.0
    %165 = vmatpush.msra.mxu0 0.0
    %166 = vmatpush.msra.mxu0 0.0
    %167 = vmatpush.msra.mxu0 0.0
    %168 = vmatpush.msra.mxu0 0.0
    %169 = vmatpush.msra.mxu0 0.0
    %170 = vmatpush.msra.mxu0 0.0
    %171 = vmatpush.msra.mxu0 0.0
    %172 = vmatpush.msra.mxu0 0.0
    %173 = vmatpush.msra.mxu0 0.0
    %174 = vmatpush.msra.mxu0 0.0
    %175 = vmatpush.msra.mxu0 %v95
    %176 = vmatpush.msra.mxu0 %v94
    %177 = vmatpush.msra.mxu0 %v93
    %178 = vmatpush.msra.mxu0 %v92
    %179 = vmatmul.f32.gmra.mxu0 %v161
    %v180 = vpop.f32.mrf.mxu0
    %v181 = vadd.f32 0.0, %v180
    %182 = vdwg.mxu0
    %v184 = vrot.slane %v181, 6
    %v186 = vadd.f32 %v87, %v184
    %v187 = vxor.u32 %v186, 2147483648
    %v188 = vmul.f32 %v187, 1.442695
    %v189 = vpow.pop %v188
    %v190 = vadd.f32 %v189, 1.0
    %v191 = vrcp.pop %v190
    %v192 = vmul.f32 %v190, %v191
    %v193 = vsub.f32 1.0, %v192
    %v194 = vmul.f32 %v191, %v193
    %v195 = vadd.f32 %v191, %v194
    %vm196 = vweird.f32 %v190
    %vm197 = vweird.f32 %v191
    %vm198 = vmor %vm196, %vm197
    %v199 = vsel %vm198, %v191, %v195
    %v200 = vand.u32 2147483647, %v190
    %vm201 = vcmp.eq.f32.partialorder %v200, 8.507059e+37
    %v202 = vand.u32 %v190, 2147483648
    %v203 = vor.u32 1.1754944e-38, %v202
    %v204 = vsel %vm201, %v203, %v199
    %v205 = vmul.f32 1.0, %v204
    %v206 = vtanh.pop %v186
    %v208 = vrot.slane %v151, 6
    %v210 = vmul.f32 %v205, %v208
    %212 = vrot.lane.b32.xlu0 %v206, 64
    %v213 = vpop.permute.xlu0 %212
    %v215 = vmul.f32 %v205, %v213
    %217 = vrot.lane.b32.xlu0 %v215, 32
    %v218 = vpop.permute.xlu0 %217
    %v220 = vadd.f32 %v210, %v218
    %v221 = vtanh.pop %v220
    %223 = vrot.lane.b32.xlu0 %v221, 64
    %v224 = vpop.permute.xlu0 %223
    %v226 = vmul.f32 %v205, %v224
    %v228 = vrot.slane %v226, 2
    %229 = vrot.lane.b32.xlu0 %v228, 32
    %v230 = vpop.permute.xlu0 %229
    %v231 = vsel %vm96, %v230, 0
    %233 = vmatpush.msra.mxu0 0.0
    %234 = vmatpush.msra.mxu0 0.0
    %235 = vmatpush.msra.mxu0 0.0
    %236 = vmatpush.msra.mxu0 0.0
    %237 = vmatpush.msra.mxu0 0.0
    %238 = vmatpush.msra.mxu0 0.0
    %239 = vmatpush.msra.mxu0 0.0
    %240 = vmatpush.msra.mxu0 0.0
    %241 = vmatpush.msra.mxu0 0.0
    %242 = vmatpush.msra.mxu0 0.0
    %243 = vmatpush.msra.mxu0 0.0
    %244 = vmatpush.msra.mxu0 0.0
    %245 = vmatpush.msra.mxu0 %v95
    %246 = vmatpush.msra.mxu0 %v94
    %247 = vmatpush.msra.mxu0 %v93
    %248 = vmatpush.msra.mxu0 %v92
    %249 = vmatmul.f32.gmra.mxu0 %v231
    %v250 = vpop.f32.mrf.mxu0
    %v251 = vadd.f32 0.0, %v250
    %252 = vdwg.mxu0
    %v254 = vrot.slane %v251, 4
    %v256 = vadd.f32 %v87, %v254
    %v257 = vxor.u32 %v256, 2147483648
    %v258 = vmul.f32 %v257, 1.442695
    %v259 = vpow.pop %v258
    %v260 = vadd.f32 %v259, 1.0
    %v261 = vrcp.pop %v260
    %v262 = vmul.f32 %v260, %v261
    %v263 = vsub.f32 1.0, %v262
    %v264 = vmul.f32 %v261, %v263
    %v265 = vadd.f32 %v261, %v264
    %vm266 = vweird.f32 %v260
    %vm267 = vweird.f32 %v261
    %vm268 = vmor %vm266, %vm267
    %v269 = vsel %vm268, %v261, %v265
    %v270 = vand.u32 2147483647, %v260
    %vm271 = vcmp.eq.f32.partialorder %v270, 8.507059e+37
    %v272 = vand.u32 %v260, 2147483648
    %v273 = vor.u32 1.1754944e-38, %v272
    %v274 = vsel %vm271, %v273, %v269
    %v275 = vmul.f32 1.0, %v274
    %v276 = vtanh.pop %v256
    %v278 = vrot.slane %v220, 6
    %v280 = vmul.f32 %v275, %v278
    %282 = vrot.lane.b32.xlu0 %v276, 64
    %v283 = vpop.permute.xlu0 %282
    %v285 = vmul.f32 %v275, %v283
    %287 = vrot.lane.b32.xlu0 %v285, 32
    %v288 = vpop.permute.xlu0 %287
    %v290 = vadd.f32 %v280, %v288
    %v291 = vtanh.pop %v290
    %293 = vrot.lane.b32.xlu0 %v291, 64
    %v294 = vpop.permute.xlu0 %293
    %v296 = vmul.f32 %v275, %v294
    %v298 = vrot.slane %v296, 4
    %299 = vrot.lane.b32.xlu0 %v298, 32
    %v300 = vpop.permute.xlu0 %299
    %v301 = vsel %vm96, %v300, 0
    %303 = vmatpush.msra.mxu0 0.0
    %304 = vmatpush.msra.mxu0 0.0
    %305 = vmatpush.msra.mxu0 0.0
    %306 = vmatpush.msra.mxu0 0.0
    %307 = vmatpush.msra.mxu0 0.0
    %308 = vmatpush.msra.mxu0 0.0
    %309 = vmatpush.msra.mxu0 0.0
    %310 = vmatpush.msra.mxu0 0.0
    %311 = vmatpush.msra.mxu0 0.0
    %312 = vmatpush.msra.mxu0 0.0
    %313 = vmatpush.msra.mxu0 0.0
    %314 = vmatpush.msra.mxu0 0.0
    %315 = vmatpush.msra.mxu0 %v95
    %316 = vmatpush.msra.mxu0 %v94
    %317 = vmatpush.msra.mxu0 %v93
    %318 = vmatpush.msra.mxu0 %v92
    %319 = vmatmul.f32.gmra.mxu0 %v301
    %v320 = vpop.f32.mrf.mxu0
    %v321 = vadd.f32 0.0, %v320
    %322 = vdwg.mxu0
    %v324 = vrot.slane %v321, 2
    %v326 = vadd.f32 %v87, %v324
    %v327 = vxor.u32 %v326, 2147483648
    %v328 = vmul.f32 %v327, 1.442695
    %v329 = vpow.pop %v328
    %v330 = vadd.f32 %v329, 1.0
    %v331 = vrcp.pop %v330
    %v332 = vmul.f32 %v330, %v331
    %v333 = vsub.f32 1.0, %v332
    %v334 = vmul.f32 %v331, %v333
    %v335 = vadd.f32 %v331, %v334
    %vm336 = vweird.f32 %v330
    %vm337 = vweird.f32 %v331
    %vm338 = vmor %vm336, %vm337
    %v339 = vsel %vm338, %v331, %v335
    %v340 = vand.u32 2147483647, %v330
    %vm341 = vcmp.eq.f32.partialorder %v340, 8.507059e+37
    %v342 = vand.u32 %v330, 2147483648
    %v343 = vor.u32 1.1754944e-38, %v342
    %v344 = vsel %vm341, %v343, %v339
    %v345 = vmul.f32 1.0, %v344
    %v346 = vtanh.pop %v326
    %v348 = vrot.slane %v290, 6
    %v350 = vmul.f32 %v345, %v348
    %352 = vrot.lane.b32.xlu0 %v346, 64
    %v353 = vpop.permute.xlu0 %352
    %v355 = vmul.f32 %v345, %v353
    %357 = vrot.lane.b32.xlu0 %v355, 32
    %v358 = vpop.permute.xlu0 %357
    %v360 = vadd.f32 %v350, %v358
    %v361 = vtanh.pop %v360
    %363 = vrot.lane.b32.xlu0 %v361, 64
    %v364 = vpop.permute.xlu0 %363
    %v366 = vmul.f32 %v345, %v364
    %v368 = vrot.slane %v366, 6
    %369 = vrot.lane.b32.xlu0 %v368, 32
    %v370 = vpop.permute.xlu0 %369
    %v371 = vsel %vm96, %v370, 0
    %373 = vmatpush.msra.mxu0 0.0
    %374 = vmatpush.msra.mxu0 0.0
    %375 = vmatpush.msra.mxu0 0.0
    %376 = vmatpush.msra.mxu0 0.0
    %377 = vmatpush.msra.mxu0 0.0
    %378 = vmatpush.msra.mxu0 0.0
    %379 = vmatpush.msra.mxu0 0.0
    %380 = vmatpush.msra.mxu0 0.0
    %381 = vmatpush.msra.mxu0 0.0
    %382 = vmatpush.msra.mxu0 0.0
    %383 = vmatpush.msra.mxu0 0.0
    %384 = vmatpush.msra.mxu0 0.0
    %385 = vmatpush.msra.mxu0 %v95
    %386 = vmatpush.msra.mxu0 %v94
    %387 = vmatpush.msra.mxu0 %v93
    %388 = vmatpush.msra.mxu0 %v92
    %389 = vmatmul.f32.gmra.mxu0 %v371
    %v390 = vpop.f32.mrf.mxu0
    %v391 = vadd.f32 0.0, %v390
    %392 = vdwg.mxu0
    %v393 = vadd.f32 %v90, %v391
    %v394 = vxor.u32 %v393, 2147483648
    %v395 = vmul.f32 %v394, 1.442695
    %v396 = vpow.pop %v395
    %v397 = vadd.f32 %v396, 1.0
    %v398 = vrcp.pop %v397
    %v399 = vmul.f32 %v397, %v398
    %v400 = vsub.f32 1.0, %v399
    %v401 = vmul.f32 %v398, %v400
    %v402 = vadd.f32 %v398, %v401
    %vm403 = vweird.f32 %v397
    %vm404 = vweird.f32 %v398
    %vm405 = vmor %vm403, %vm404
    %v406 = vsel %vm405, %v398, %v402
    %v407 = vand.u32 2147483647, %v397
    %vm408 = vcmp.eq.f32.partialorder %v407, 8.507059e+37
    %v409 = vand.u32 %v397, 2147483648
    %v410 = vor.u32 1.1754944e-38, %v409
    %v411 = vsel %vm408, %v410, %v406
    %v412 = vmul.f32 1.0, %v411
    %v413 = vtanh.pop %v393
    %v415 = vrot.slane %v360, 6
    %v417 = vmul.f32 %v412, %v415
    %419 = vrot.lane.b32.xlu0 %v413, 64
    %v420 = vpop.permute.xlu0 %419
    %v422 = vmul.f32 %v412, %v420
    %424 = vrot.lane.b32.xlu0 %v422, 32
    %v425 = vpop.permute.xlu0 %424
    %v427 = vadd.f32 %v417, %v425
    %v428 = vtanh.pop %v427
    %430 = vrot.lane.b32.xlu0 %v428, 64
    %v431 = vpop.permute.xlu0 %430
    %v433 = vmul.f32 %v412, %v431
    %435 = vrot.lane.b32.xlu0 %v433, 32
    %v436 = vpop.permute.xlu0 %435
    %v437 = vsel %vm96, %v436, 0
    %439 = vmatpush.msra.mxu0 0.0
    %440 = vmatpush.msra.mxu0 0.0
    %441 = vmatpush.msra.mxu0 0.0
    %442 = vmatpush.msra.mxu0 0.0
    %443 = vmatpush.msra.mxu0 0.0
    %444 = vmatpush.msra.mxu0 0.0
    %445 = vmatpush.msra.mxu0 0.0
    %446 = vmatpush.msra.mxu0 0.0
    %447 = vmatpush.msra.mxu0 0.0
    %448 = vmatpush.msra.mxu0 0.0
    %449 = vmatpush.msra.mxu0 0.0
    %450 = vmatpush.msra.mxu0 0.0
    %451 = vmatpush.msra.mxu0 %v95
    %452 = vmatpush.msra.mxu0 %v94
    %453 = vmatpush.msra.mxu0 %v93
    %454 = vmatpush.msra.mxu0 %v92
    %455 = vmatmul.f32.gmra.mxu0 %v437
    %v456 = vpop.f32.mrf.mxu0
    %v457 = vadd.f32 0.0, %v456
    %458 = vdwg.mxu0
    %v460 = vrot.slane %v457, 6
    %v462 = vadd.f32 %v90, %v460
    %v463 = vxor.u32 %v462, 2147483648
    %v464 = vmul.f32 %v463, 1.442695
    %v465 = vpow.pop %v464
    %v466 = vadd.f32 %v465, 1.0
    %v467 = vrcp.pop %v466
    %v468 = vmul.f32 %v466, %v467
    %v469 = vsub.f32 1.0, %v468
    %v470 = vmul.f32 %v467, %v469
    %v471 = vadd.f32 %v467, %v470
    %vm472 = vweird.f32 %v466
    %vm473 = vweird.f32 %v467
    %vm474 = vmor %vm472, %vm473
    %v475 = vsel %vm474, %v467, %v471
    %v476 = vand.u32 2147483647, %v466
    %vm477 = vcmp.eq.f32.partialorder %v476, 8.507059e+37
    %v478 = vand.u32 %v466, 2147483648
    %v479 = vor.u32 1.1754944e-38, %v478
    %v480 = vsel %vm477, %v479, %v475
    %v481 = vmul.f32 1.0, %v480
    %v482 = vtanh.pop %v462
    %v484 = vrot.slane %v427, 6
    %v486 = vmul.f32 %v481, %v484
    %488 = vrot.lane.b32.xlu0 %v482, 64
    %v489 = vpop.permute.xlu0 %488
    %v491 = vmul.f32 %v481, %v489
    %493 = vrot.lane.b32.xlu0 %v491, 32
    %v494 = vpop.permute.xlu0 %493
    %v496 = vadd.f32 %v486, %v494
    %v497 = vtanh.pop %v496
    %499 = vrot.lane.b32.xlu0 %v497, 64
    %v500 = vpop.permute.xlu0 %499
    %v502 = vmul.f32 %v481, %v500
    %v504 = vrot.slane %v502, 2
    %505 = vrot.lane.b32.xlu0 %v504, 32
    %v506 = vpop.permute.xlu0 %505
    %v507 = vsel %vm96, %v506, 0
    %509 = vmatpush.msra.mxu0 0.0
    %510 = vmatpush.msra.mxu0 0.0
    %511 = vmatpush.msra.mxu0 0.0
    %512 = vmatpush.msra.mxu0 0.0
    %513 = vmatpush.msra.mxu0 0.0
    %514 = vmatpush.msra.mxu0 0.0
    %515 = vmatpush.msra.mxu0 0.0
    %516 = vmatpush.msra.mxu0 0.0
    %517 = vmatpush.msra.mxu0 0.0
    %518 = vmatpush.msra.mxu0 0.0
    %519 = vmatpush.msra.mxu0 0.0
    %520 = vmatpush.msra.mxu0 0.0
    %521 = vmatpush.msra.mxu0 %v95
    %522 = vmatpush.msra.mxu0 %v94
    %523 = vmatpush.msra.mxu0 %v93
    %524 = vmatpush.msra.mxu0 %v92
    %525 = vmatmul.f32.gmra.mxu0 %v507
    %v526 = vpop.f32.mrf.mxu0
    %v527 = vadd.f32 0.0, %v526
    %528 = vdwg.mxu0
    %v530 = vrot.slane %v527, 4
    %v532 = vadd.f32 %v90, %v530
    %v533 = vxor.u32 %v532, 2147483648
    %v534 = vmul.f32 %v533, 1.442695
    %v535 = vpow.pop %v534
    %v536 = vadd.f32 %v535, 1.0
    %v537 = vrcp.pop %v536
    %v538 = vmul.f32 %v536, %v537
    %v539 = vsub.f32 1.0, %v538
    %v540 = vmul.f32 %v537, %v539
    %v541 = vadd.f32 %v537, %v540
    %vm542 = vweird.f32 %v536
    %vm543 = vweird.f32 %v537
    %vm544 = vmor %vm542, %vm543
    %v545 = vsel %vm544, %v537, %v541
    %v546 = vand.u32 2147483647, %v536
    %vm547 = vcmp.eq.f32.partialorder %v546, 8.507059e+37
    %v548 = vand.u32 %v536, 2147483648
    %v549 = vor.u32 1.1754944e-38, %v548
    %v550 = vsel %vm547, %v549, %v545
    %v551 = vmul.f32 1.0, %v550
    %v552 = vtanh.pop %v532
    %v554 = vrot.slane %v496, 6
    %v556 = vmul.f32 %v551, %v554
    %558 = vrot.lane.b32.xlu0 %v552, 64
    %v559 = vpop.permute.xlu0 %558
    %v561 = vmul.f32 %v551, %v559
    %563 = vrot.lane.b32.xlu0 %v561, 32
    %v564 = vpop.permute.xlu0 %563
    %v566 = vadd.f32 %v556, %v564
    %v567 = vtanh.pop %v566
    %569 = vrot.lane.b32.xlu0 %v567, 64
    %v570 = vpop.permute.xlu0 %569
    %v572 = vmul.f32 %v551, %v570
    %v574 = vrot.slane %v572, 4
    %575 = vrot.lane.b32.xlu0 %v574, 32
    %v576 = vpop.permute.xlu0 %575
    %v577 = vsel %vm96, %v576, 0
    %579 = vmatpush.msra.mxu0 0.0
    %580 = vmatpush.msra.mxu0 0.0
    %581 = vmatpush.msra.mxu0 0.0
    %582 = vmatpush.msra.mxu0 0.0
    %583 = vmatpush.msra.mxu0 0.0
    %584 = vmatpush.msra.mxu0 0.0
    %585 = vmatpush.msra.mxu0 0.0
    %586 = vmatpush.msra.mxu0 0.0
    %587 = vmatpush.msra.mxu0 0.0
    %588 = vmatpush.msra.mxu0 0.0
    %589 = vmatpush.msra.mxu0 0.0
    %590 = vmatpush.msra.mxu0 0.0
    %591 = vmatpush.msra.mxu0 %v95
    %592 = vmatpush.msra.mxu0 %v94
    %593 = vmatpush.msra.mxu0 %v93
    %594 = vmatpush.msra.mxu0 %v92
    %595 = vmatmul.f32.gmra.mxu0 %v577
    %v596 = vpop.f32.mrf.mxu0
    %v597 = vadd.f32 0.0, %v596
    %598 = vdwg.mxu0
    %v600 = vrot.slane %v597, 2
    %v602 = vadd.f32 %v90, %v600
    %v603 = vxor.u32 %v602, 2147483648
    %v604 = vmul.f32 %v603, 1.442695
    %v605 = vpow.pop %v604
    %v606 = vadd.f32 %v605, 1.0
    %v607 = vrcp.pop %v606
    %v608 = vmul.f32 %v606, %v607
    %v609 = vsub.f32 1.0, %v608
    %v610 = vmul.f32 %v607, %v609
    %v611 = vadd.f32 %v607, %v610
    %vm612 = vweird.f32 %v606
    %vm613 = vweird.f32 %v607
    %vm614 = vmor %vm612, %vm613
    %v615 = vsel %vm614, %v607, %v611
    %v616 = vand.u32 2147483647, %v606
    %vm617 = vcmp.eq.f32.partialorder %v616, 8.507059e+37
    %v618 = vand.u32 %v606, 2147483648
    %v619 = vor.u32 1.1754944e-38, %v618
    %v620 = vsel %vm617, %v619, %v615
    %v621 = vmul.f32 1.0, %v620
    %v622 = vtanh.pop %v602
    %v624 = vrot.slane %v566, 6
    %v626 = vmul.f32 %v621, %v624
    %628 = vrot.lane.b32.xlu0 %v622, 64
    %v629 = vpop.permute.xlu0 %628
    %v631 = vmul.f32 %v621, %v629
    %633 = vrot.lane.b32.xlu0 %v631, 32
    %v634 = vpop.permute.xlu0 %633
    %v636 = vadd.f32 %v626, %v634
    %v637 = vtanh.pop %v636
    %639 = vrot.lane.b32.xlu0 %v637, 64
    %v640 = vpop.permute.xlu0 %639
    %v642 = vmul.f32 %v621, %v640
    %v643 = vld [vmem:[%s3] sm:$0xff]
    %v644 = vld [vmem:[%s3 + $0x8] sm:$0xff]
    %v645 = vld [vmem:[%s3 + $0x10] sm:$0xff]
    %v646 = vld [vmem:[%s3 + $0x18] sm:$0xff]
    %v647 = vld [vmem:[%s4] sm:$0x1]
    %v649 = vperm.slane %v647, 0
    %v652 = vrot.slane %v642, 6
    %653 = vrot.lane.b32.xlu0 %v652, 32
    %v654 = vpop.permute.xlu0 %653
    %v655 = vsel %vm96, %v654, 0
    %657 = vmatpush.msra.mxu0 0.0
    %658 = vmatpush.msra.mxu0 0.0
    %659 = vmatpush.msra.mxu0 0.0
    %660 = vmatpush.msra.mxu0 0.0
    %661 = vmatpush.msra.mxu0 0.0
    %662 = vmatpush.msra.mxu0 0.0
    %663 = vmatpush.msra.mxu0 0.0
    %664 = vmatpush.msra.mxu0 0.0
    %665 = vmatpush.msra.mxu0 0.0
    %666 = vmatpush.msra.mxu0 0.0
    %667 = vmatpush.msra.mxu0 0.0
    %668 = vmatpush.msra.mxu0 0.0
    %669 = vmatpush.msra.mxu0 %v646
    %670 = vmatpush.msra.mxu0 %v645
    %671 = vmatpush.msra.mxu0 %v644
    %672 = vmatpush.msra.mxu0 %v643
    %673 = vmatmul.f32.gmra.mxu0 %v655
    %v674 = vpop.f32.mrf.mxu0
    %v675 = vadd.f32 %v649, %v674
    %676 = vdwg.mxu0
    %v677 = vxor.u32 %v675, 2147483648
    %v678 = vmul.f32 %v677, 1.442695
    %v679 = vpow.pop %v678
    %v680 = vadd.f32 %v679, 1.0
    %v681 = vrcp.pop %v680
    %v682 = vmul.f32 %v680, %v681
    %v683 = vsub.f32 1.0, %v682
    %v684 = vmul.f32 %v681, %v683
    %v685 = vadd.f32 %v681, %v684
    %vm686 = vweird.f32 %v680
    %vm687 = vweird.f32 %v681
    %vm688 = vmor %vm686, %vm687
    %v689 = vsel %vm688, %v681, %v685
    %v690 = vand.u32 2147483647, %v680
    %vm691 = vcmp.eq.f32.partialorder %v690, 8.507059e+37
    %v692 = vand.u32 %v680, 2147483648
    %v693 = vor.u32 1.1754944e-38, %v692
    %v694 = vsel %vm691, %v693, %v689
    %v695 = vmul.f32 1.0, %v694
    %vm696 = vcmask 33792
    %697 = vst.msk [vmem:[#allocation5] sm:$0x3] %vm696, %v695
    // Predicated region
    $region26: #{tpu_custom_call.1} parent=1 // pred_check
      _
    $region27: #{tpu_custom_call.1} parent=1 // pred_check_branch
      %699 = sbr.rel (0) target = $region29
    $region28: #{tpu_custom_call.1} parent=1 // pred_region
      %701 = vsyncadd [#allocation4], 0
      %s703 = sshll.u32 [#allocation5], 4
      %s704 = int_to_ptr.vmem [resolvable:$true] %s703
      %s705 = sshll.u32 %s5, 4
      %s706 = int_to_ptr.hbm [resolvable:$true] %s705
      %708 = dma.vmem_to_hbm [thread:$0]  %s704, 32, %s706, [#allocation4]
    $region29: #{tpu_custom_call.1} parent=1 // pred_fallthru
      _
    // Predicated region
    $region30: #{tpu_custom_call.1} parent=1 // pred_check
      _
    $region31: #{tpu_custom_call.1} parent=1 // pred_check_branch
      %710 = sbr.rel (0) target = $region33
    $region32: #{tpu_custom_call.1} parent=1 // pred_region
      %712 = dma.done [#allocation4], 32
    $region33: #{tpu_custom_call.1} parent=1 // pred_fallthru
      _
    %713 = vsyncpa [#allocation3], 1
    %714 = vsyncpa [#allocation4], 1

</llo_original>
